<compile_context>
chip_gen: v7x
topology: tpu7x:2x2x1
jax: 0.10.0
libtpu: 0.0.40
codegen_flags: <defaults>
</compile_context>

<pallas_src>
import jax
import jax.numpy as jnp
from jax.experimental import pallas as pl
from jax.experimental.pallas import tpu as pltpu


def modality_adapter_kernel(x_ref, w1_ref, b1_ref, w2_ref, b2_ref, o_ref):
    # First projection: tiny ([B_pad, E] @ [E, D]), recomputed per output tile.
    # x/W1/b1/b2 blocks are grid-invariant -> fetched from HBM once, VMEM resident;
    # the recompute is MXU work hidden under the W2 tile DMA and keeps the grid
    # axis stateless (safe to shard across TensorCores on v7x).
    h = jnp.dot(x_ref[...], w1_ref[...], preferred_element_type=jnp.float32)
    h = h + b1_ref[...]                         # bias applied exactly once (f32)
    # Dropout: identity at inference.
    # TODO(synk): training-mode dropout would need pltpu.prng_seed + prng_random_bits.
    h = h.astype(w2_ref.dtype)                  # bf16 LHS -> MXU fast path
    # Second projection for this output tile: [B_pad, D] @ [D, TN].
    out = jnp.dot(h, w2_ref[...], preferred_element_type=jnp.float32)
    tn = o_ref.shape[1]
    col = pl.multiple_of(pl.program_id(0) * tn, 128)
    out = out + b2_ref[:, pl.ds(col, tn)]       # b2 resident; sliced, not streamed
    o_ref[...] = out.astype(o_ref.dtype)


def _round_up(x, m):
    return (x + m - 1) // m * m


def _nbytes(shape, dtype):
    n = 1
    for s in shape:
        n *= s
    return n * jnp.dtype(dtype).itemsize


def _vmem_budget_bytes():
    """Generation-aware VMEM budget: ~3/4 of physical VMEM per TensorCore
    (v5e/v6e: 128 MiB -> ~96 MiB; v7x: 64 MiB -> 48 MiB)."""
    phys = 64 << 20  # conservative fallback (v7x-sized)
    try:
        phys = int(pltpu.get_tpu_info().vmem_capacity_bytes)
    except Exception:
        pass
    return (phys * 3) // 4


def prepare_modality_adapter_params(w1, b1, w2, b2, *, compute_dtype=jnp.bfloat16,
                                    max_batch=64):
    """One-time weight prep (call at init / param load, NOT per forward call).

    w1: [E, D]   (pre-transposed vs torch's [out, in])
    b1: [1, D] or [D]
    w2: [D, N]   with N = D * n_modality_embs
    b2: [1, N] or [N]
    """
    E, D = w1.shape
    N = w2.shape[1]
    itemsize = jnp.dtype(compute_dtype).itemsize
    row_min = 16 if itemsize == 2 else 8
    b_pad_hint = _round_up(max(max_batch, row_min), row_min)

    N_pad = _round_up(N, 128)
    budget = _vmem_budget_bytes()

    # Resident (grid-invariant) blocks: x, W1, b1, b2.  Streamed per tile: W2, out.
    # Everything is counted double-buffered (Pallas' default) so the TN choice is
    # always allocatable.  If the footprint would not fit, we shrink TN here rather
    # than clamping vmem_limit_bytes below the real footprint at call time.
    # TODO(synk): pipeline_mode=pl.Buffered(1) on the invariant inputs (and
    # Buffered(3) on W2) would free/redirect VMEM on v7x's tighter 64 MiB budget.
    resident = (b_pad_hint * E + E * D) * itemsize + (D + N_pad) * 4
    headroom = 4 << 20
    TN = 128
    for cand in (1024, 512, 256, 128):
        if N_pad % cand:
            continue
        streamed = D * cand * itemsize + b_pad_hint * cand * 4
        if 2 * (resident + streamed) + headroom <= budget:
            TN = cand
            break

    w1c = w1.astype(compute_dtype)
    b1c = jnp.asarray(b1, jnp.float32).reshape(1, D)
    w2c = w2.astype(compute_dtype)
    b2c = jnp.asarray(b2, jnp.float32).reshape(1, N)
    if N_pad != N:
        w2c = jnp.pad(w2c, ((0, 0), (0, N_pad - N)))
        b2c = jnp.pad(b2c, ((0, 0), (0, N_pad - N)))
    # Tile-major, per-tile-contiguous layout: [N_pad//TN, D, TN].
    w2t = w2c.reshape(D, N_pad // TN, TN).transpose(1, 0, 2)
    w2t = jax.block_until_ready(w2t)  # materialize once, at prep time

    return {
        "w1": w1c, "b1": b1c, "w2_tiles": w2t, "b2": b2c,
        "E": E, "D": D, "N": N, "N_pad": N_pad, "TN": TN,
        "compute_dtype": compute_dtype,
    }


def modality_adapter(x, params):
    """x: [B, E]; params: output of prepare_modality_adapter_params()."""
    E, D = params["E"], params["D"]
    N, N_pad, TN = params["N"], params["N_pad"], params["TN"]
    compute_dtype = params["compute_dtype"]
    w1c, b1c, w2t, b2c = params["w1"], params["b1"], params["w2_tiles"], params["b2"]

    B = x.shape[0]
    out_dtype = x.dtype
    itemsize = jnp.dtype(compute_dtype).itemsize
    row_min = 16 if itemsize == 2 else 8

    # Pad batch to the sublane minimum so the MXU LHS isn't a 2-row ribbon.
    B_pad = _round_up(max(B, row_min), row_min)
    xc = x.astype(compute_dtype)
    if B_pad != B:
        xc = jnp.pad(xc, ((0, B_pad - B), (0, 0)))

    grid = (N_pad // TN,)

    # VMEM footprint (all blocks counted double-buffered) + headroom.  The cap is
    # generation-aware and never set below the real footprint (TN was already sized
    # at prep time to fit the same budget).
    vmem_needed = 2 * (
        _nbytes((B_pad, E), compute_dtype)
        + _nbytes((E, D), compute_dtype)
        + _nbytes((1, D), jnp.float32)
        + _nbytes((1, N_pad), jnp.float32)
        + _nbytes((D, TN), compute_dtype)
        + _nbytes((B_pad, TN), out_dtype)
    ) + (4 << 20)
    budget = _vmem_budget_bytes()
    vmem_limit = max(vmem_needed, 16 << 20)
    vmem_limit = min(vmem_limit, max(budget, vmem_needed))

    out_padded = pl.pallas_call(
        modality_adapter_kernel,
        out_shape=jax.ShapeDtypeStruct((B_pad, N_pad), out_dtype),
        grid_spec=pltpu.PrefetchScalarGridSpec(
            num_scalar_prefetch=0,
            grid=grid,
            in_specs=[
                pl.BlockSpec((B_pad, E), lambda j: (0, 0)),        # x : VMEM-resident
                pl.BlockSpec((E, D), lambda j: (0, 0)),            # W1: VMEM-resident
                pl.BlockSpec((1, D), lambda j: (0, 0)),            # b1: VMEM-resident
                pl.BlockSpec((None, D, TN), lambda j: (j, 0, 0)),  # W2: contiguous tile stream
                pl.BlockSpec((1, N_pad), lambda j: (0, 0)),        # b2: VMEM-resident
            ],
            out_specs=pl.BlockSpec((B_pad, TN), lambda j: (0, j)),
        ),
        compiler_params=pltpu.CompilerParams(
            # N tiles are independent -> shard across the 2 TCs on v7x; harmless on
            # single-core v5e/v6e.
            dimension_semantics=("parallel",),
            vmem_limit_bytes=int(vmem_limit),
        ),
    )(xc, w1c, b1c, w2t, b2c)

    return out_padded[:B, :N]


def init_params(key, encoder_emb_dim, language_model_dim, n_modality_embs,
                dtype=jnp.float32):
    """torch.nn.Linear-style init: U[-1/sqrt(fan_in), +1/sqrt(fan_in)].

    Weights are stored pre-transposed ([in, out]) relative to torch ([out, in]).
    """
    k1, k2, k3, k4 = jax.random.split(key, 4)
    lim1 = 1.0 / (encoder_emb_dim ** 0.5)
    lim2 = 1.0 / (language_model_dim ** 0.5)
    d_out2 = language_model_dim * n_modality_embs
    w1 = jax.random.uniform(k1, (encoder_emb_dim, language_model_dim), dtype,
                            minval=-lim1, maxval=lim1)
    b1 = jax.random.uniform(k2, (1, language_model_dim), dtype,
                            minval=-lim1, maxval=lim1)
    w2 = jax.random.uniform(k3, (language_model_dim, d_out2), dtype,
                            minval=-lim2, maxval=lim2)
    b2 = jax.random.uniform(k4, (1, d_out2), dtype,
                            minval=-lim2, maxval=lim2)
    return w1, b1, w2, b2


if __name__ == "__main__":
    # Small shapes consistent with the module's forward.
    batch = 2
    encoder_emb_dim = 32
    language_model_dim = 32
    n_modality_embs = 2
    dropout_prob = 0.1  # identity at inference

    key = jax.random.PRNGKey(0)
    kx, kp = jax.random.split(key)
    x = jax.random.normal(kx, (batch, encoder_emb_dim), jnp.float32)
    w1, b1, w2, b2 = init_params(kp, encoder_emb_dim, language_model_dim,
                                 n_modality_embs)

    # One-time weight prep (init / param-load time, NOT per call).
    params = prepare_modality_adapter_params(w1, b1, w2, b2)

    out = modality_adapter(x, params)
    out = jax.block_until_ready(out)

    # Pure-JAX reference with the same numerics as the kernel
    # (bf16 inputs/weights, f32 accumulation, bf16 intermediate h).
    # TODO(synk): h is rounded to bf16 (inference-grade); keep h in f32 if
    # bit-closer parity with the fp32 torch forward is required.
    xr = x.astype(jnp.bfloat16).astype(jnp.float32)
    w1r = w1.astype(jnp.bfloat16).astype(jnp.float32)
    w2r = w2.astype(jnp.bfloat16).astype(jnp.float32)
    h_ref = xr @ w1r + b1.reshape(1, -1).astype(jnp.float32)
    h_ref = h_ref.astype(jnp.bfloat16).astype(jnp.float32)
    ref = h_ref @ w2r + b2.reshape(1, -1).astype(jnp.float32)

    out_f32 = out.astype(jnp.float32)
    assert out.shape == (batch, language_model_dim * n_modality_embs)
    assert jnp.allclose(out_f32, ref, atol=1e-2, rtol=1e-2), (
        float(jnp.max(jnp.abs(out_f32 - ref))))

    print("KERNEL_OK")
</pallas_src>

<mosaic_0001>
module attributes {stable_mosaic.version = 11 : i64} {
  func.func @modality_adapter_kernel(%arg0: i32, %arg1: memref<16x32xbf16, #tpu.memory_space<vmem>>, %arg2: memref<32x32xbf16, #tpu.memory_space<vmem>>, %arg3: memref<1x32xf32, #tpu.memory_space<vmem>>, %arg4: memref<1x32x128xbf16, #tpu.memory_space<vmem>>, %arg5: memref<1x128xf32, #tpu.memory_space<vmem>>, %arg6: memref<16x128xf32, #tpu.memory_space<vmem>>) attributes {dimension_semantics = [#tpu.dimension_semantics<parallel>], iteration_bounds = array<i64: 1>, scalar_prefetch = 0 : i64, scratch_operands = 0 : i64, tpu.core_type = #tpu.core_type<tc>, window_params = [{pipeline_mode = #tpu.pipeline_mode<synchronous>, transform_indices = @transform_0, window_bounds = array<i64: 16, 32>}, {pipeline_mode = #tpu.pipeline_mode<synchronous>, transform_indices = @transform_1, window_bounds = array<i64: 32, 32>}, {pipeline_mode = #tpu.pipeline_mode<synchronous>, transform_indices = @transform_2, window_bounds = array<i64: 1, 32>}, {transform_indices = @transform_3, window_bounds = array<i64: 1, 32, 128>}, {pipeline_mode = #tpu.pipeline_mode<synchronous>, transform_indices = @transform_4, window_bounds = array<i64: 1, 128>}, {transform_indices = @transform_5, window_bounds = array<i64: 16, 128>}]} {
    %c0 = arith.constant 0 : index
    %c0_0 = arith.constant 0 : index
    %0 = vector.load %arg1[%c0, %c0_0] : memref<16x32xbf16, #tpu.memory_space<vmem>>, vector<16x32xbf16>
    %c0_1 = arith.constant 0 : index
    %c0_2 = arith.constant 0 : index
    %1 = vector.load %arg2[%c0_1, %c0_2] : memref<32x32xbf16, #tpu.memory_space<vmem>>, vector<32x32xbf16>
    %cst = arith.constant dense<0.000000e+00> : vector<16x32xf32>
    %2 = tpu.matmul %0, %1, %cst {dimension_numbers = #tpu.dot_dimension_numbers<[1], [0], [0], [1], [0, 0, 1, 1], [], []>} : vector<16x32xbf16>, vector<32x32xbf16>, vector<16x32xf32> -> vector<16x32xf32>
    %c0_3 = arith.constant 0 : index
    %c0_4 = arith.constant 0 : index
    %3 = vector.load %arg3[%c0_3, %c0_4] : memref<1x32xf32, #tpu.memory_space<vmem>>, vector<1x32xf32>
    %4 = vector.broadcast %3 : vector<1x32xf32> to vector<16x32xf32>
    %5 = arith.addf %2, %4 : vector<16x32xf32>
    %6 = arith.truncf %5 : vector<16x32xf32> to vector<16x32xbf16>
    %c0_5 = arith.constant 0 : index
    %c0_6 = arith.constant 0 : index
    %c0_7 = arith.constant 0 : index
    %7 = vector.load %arg4[%c0_5, %c0_6, %c0_7] : memref<1x32x128xbf16, #tpu.memory_space<vmem>>, vector<1x32x128xbf16>
    %8 = vector.shape_cast %7 : vector<1x32x128xbf16> to vector<32x128xbf16>
    %cst_8 = arith.constant dense<0.000000e+00> : vector<16x128xf32>
    %9 = tpu.matmul %6, %8, %cst_8 {dimension_numbers = #tpu.dot_dimension_numbers<[1], [0], [0], [1], [0, 0, 1, 1], [], []>} : vector<16x32xbf16>, vector<32x128xbf16>, vector<16x128xf32> -> vector<16x128xf32>
    %c128_i32 = arith.constant 128 : i32
    %10 = arith.muli %arg0, %c128_i32 : i32
    %11 = tpu.assume_multiple %10, 128 : i32
    %c0_9 = arith.constant 0 : index
    %12 = arith.index_cast %11 : i32 to index
    %13 = vector.load %arg5[%c0_9, %12] : memref<1x128xf32, #tpu.memory_space<vmem>>, vector<1x128xf32>
    %14 = vector.broadcast %13 : vector<1x128xf32> to vector<16x128xf32>
    %15 = arith.addf %9, %14 : vector<16x128xf32>
    %c0_10 = arith.constant 0 : index
    %c0_11 = arith.constant 0 : index
    %16 = vector.load %arg6[%c0_10, %c0_11] : memref<16x128xf32, #tpu.memory_space<vmem>>, vector<16x128xf32>
    tpu.vector_store %arg6[%c0_10, %c0_11], %15 {strides = array<i32>} : memref<16x128xf32, #tpu.memory_space<vmem>>, vector<16x128xf32>,
    return
  }
  func.func @transform_0(%arg0: i32) -> (i32, i32) {
    %c0_i32 = arith.constant 0 : i32
    %c0_i32_0 = arith.constant 0 : i32
    %c0_i32_1 = arith.constant 0 : i32
    return %c0_i32, %c0_i32_0 : i32, i32
  }
  func.func @transform_1(%arg0: i32) -> (i32, i32) {
    %c0_i32 = arith.constant 0 : i32
    %c0_i32_0 = arith.constant 0 : i32
    %c0_i32_1 = arith.constant 0 : i32
    return %c0_i32, %c0_i32_0 : i32, i32
  }
  func.func @transform_2(%arg0: i32) -> (i32, i32) {
    %c0_i32 = arith.constant 0 : i32
    %c0_i32_0 = arith.constant 0 : i32
    %c0_i32_1 = arith.constant 0 : i32
    return %c0_i32, %c0_i32_0 : i32, i32
  }
  func.func @transform_3(%arg0: i32) -> (i32, i32, i32) {
    %c0_i32 = arith.constant 0 : i32
    %c0_i32_0 = arith.constant 0 : i32
    %c0_i32_1 = arith.constant 0 : i32
    return %arg0, %c0_i32, %c0_i32_0 : i32, i32, i32
  }
  func.func @transform_4(%arg0: i32) -> (i32, i32) {
    %c0_i32 = arith.constant 0 : i32
    %c0_i32_0 = arith.constant 0 : i32
    %c0_i32_1 = arith.constant 0 : i32
    return %c0_i32, %c0_i32_0 : i32, i32
  }
  func.func @transform_5(%arg0: i32) -> (i32, i32) {
    %c0_i32 = arith.constant 0 : i32
    %c0_i32_0 = arith.constant 0 : i32
    return %c0_i32, %arg0 : i32, i32
  }
}

</mosaic_0001>

<llo_original>
// kernel: tpu_custom_call.1
$region0: #{tpu_custom_call.1}
  #allocation0 [shape = 'u32[]', space=smem, size = 0x4, offset = 0x4, fixed_abs, tag = 'smem constant byte address 0x4 - core index']
  #allocation1 [shape = 'u32[144,128]{1,0:T(1,128)}', space=vmem, size = 0x12000, scoped, tag = 'internal scratch']
  %s0 = inlined_call_operand.hbm [shape: bf16[16,32], index: 0, kind: input, shape index: {}]
  %s1 = inlined_call_operand.hbm [shape: bf16[32,32], index: 1, kind: input, shape index: {}]
  %s2 = inlined_call_operand.vmem [shape: f32[1,32], index: 2, kind: input, shape index: {}]
  %s3 = inlined_call_operand.hbm [shape: bf16[1,32,128], index: 3, kind: input, shape index: {}]
  %s4 = inlined_call_operand.vmem [shape: f32[1,128], index: 4, kind: input, shape index: {}]
  %s5 = inlined_call_operand.hbm [shape: f32[16,128], index: 5, kind: output, shape index: {}]
  %s6 = sld [smem:[#allocation0]]
  $region42: #{tpu_custom_call.1} parent=0
    _
  %s8 = ssub.s32 1, %s6
  %s9 = scalar_select 0, %s8, %s6
  $region1: #{tpu_custom_call.1} parent=0
    #allocation2 [shape = 'u8[4096]{0}', space=vmem, size = 0x1000, scoped, tag = 'input window, operand 0, single buffered']
    #allocation3 [shape = 's32[1]{0}', space=sflag, size = 0x4, scoped, tag = 'scoped memory for tpu_custom_call.1']
    #allocation4 [shape = 's32[1]{0}', space=sflag, size = 0x4, scoped, tag = 'scoped memory for tpu_custom_call.1']
    #allocation5 [shape = 'u8[8192]{0}', space=vmem, size = 0x2000, scoped, tag = 'input window, operand 1, single buffered']
    #allocation6 [shape = 's32[1]{0}', space=sflag, size = 0x4, scoped, tag = 'scoped memory for tpu_custom_call.1']
    #allocation7 [shape = 'u8[8192]{0}', space=vmem, size = 0x2000, scoped, tag = 'input window, operand 3, single buffered']
    #allocation8 [shape = 'u8[8192]{0}', space=vmem, size = 0x2000, scoped, tag = 'output window, operand 0, single buffered']
    %10 = vsyncpa [#allocation3], 0
    %11 = vsyncpa [#allocation6], 0
    %12 = vsyncpa [#allocation4], 0
    // Predicated region
    $region2: #{tpu_custom_call.1} parent=1 // pred_check
      _
    $region3: #{tpu_custom_call.1} parent=1 // pred_check_branch
      %14 = sbr.rel (0) target = $region5
    $region4: #{tpu_custom_call.1} parent=1 // pred_region
      %s16 = ssub.s32 128, 128
      %17 = vsyncadd [#allocation3], %s16
      %s18 = sshll.u32 [#allocation2], 4
      %s19 = int_to_ptr.vmem [resolvable:$true] %s18
      %24 = dma.hbm_to_vmem [thread:$0]  %s0, 128, %s19, [#allocation3], 64, 64, 4
    $region5: #{tpu_custom_call.1} parent=1 // pred_fallthru
      _
    // Predicated region
    $region6: #{tpu_custom_call.1} parent=1 // pred_check
      _
    $region7: #{tpu_custom_call.1} parent=1 // pred_check_branch
      %26 = sbr.rel (0) target = $region9
    $region8: #{tpu_custom_call.1} parent=1 // pred_region
      %s28 = ssub.s32 256, 256
      %29 = vsyncadd [#allocation6], %s28
      %s30 = sshll.u32 [#allocation5], 4
      %s31 = int_to_ptr.vmem [resolvable:$true] %s30
      %36 = dma.hbm_to_vmem [thread:$0]  %s1, 256, %s31, [#allocation6], 64, 64, 4
    $region9: #{tpu_custom_call.1} parent=1 // pred_fallthru
      _
    // Predicated region
    $region10: #{tpu_custom_call.1} parent=1 // pred_check
      _
    $region11: #{tpu_custom_call.1} parent=1 // pred_check_branch
      %38 = sbr.rel (0) target = $region13
    $region12: #{tpu_custom_call.1} parent=1 // pred_region
      _
    $region13: #{tpu_custom_call.1} parent=1 // pred_fallthru
      _
    // Predicated region
    $region14: #{tpu_custom_call.1} parent=1 // pred_check
      _
    $region15: #{tpu_custom_call.1} parent=1 // pred_check_branch
      %40 = sbr.rel (0) target = $region17
    $region16: #{tpu_custom_call.1} parent=1 // pred_region
      %s42 = ssub.s32 256, 256
      %43 = vsyncadd [#allocation6], %s42
      %s44 = sshll.u32 [#allocation7], 4
      %s45 = int_to_ptr.vmem [resolvable:$true] %s44
      %50 = dma.hbm_to_vmem [thread:$0]  %s3, 256, %s45, [#allocation6], 64, 64, 4
    $region17: #{tpu_custom_call.1} parent=1 // pred_fallthru
      _
    // Predicated region
    $region18: #{tpu_custom_call.1} parent=1 // pred_check
      _
    $region19: #{tpu_custom_call.1} parent=1 // pred_check_branch
      %52 = sbr.rel (0) target = $region21
    $region20: #{tpu_custom_call.1} parent=1 // pred_region
      _
    $region21: #{tpu_custom_call.1} parent=1 // pred_fallthru
      _
    // Predicated region
    $region22: #{tpu_custom_call.1} parent=1 // pred_check
      _
    $region23: #{tpu_custom_call.1} parent=1 // pred_check_branch
      %54 = sbr.rel (0) target = $region25
    $region24: #{tpu_custom_call.1} parent=1 // pred_region
      %55 = dma.done [#allocation3], 128
    $region25: #{tpu_custom_call.1} parent=1 // pred_fallthru
      _
    // Predicated region
    $region26: #{tpu_custom_call.1} parent=1 // pred_check
      _
    $region27: #{tpu_custom_call.1} parent=1 // pred_check_branch
      %57 = sbr.rel (0) target = $region29
    $region28: #{tpu_custom_call.1} parent=1 // pred_region
      %58 = dma.done [#allocation6], 256
    $region29: #{tpu_custom_call.1} parent=1 // pred_fallthru
      _
    // Predicated region
    $region30: #{tpu_custom_call.1} parent=1 // pred_check
      _
    $region31: #{tpu_custom_call.1} parent=1 // pred_check_branch
      %60 = sbr.rel (0) target = $region33
    $region32: #{tpu_custom_call.1} parent=1 // pred_region
      %61 = dma.done [#allocation6], 256
    $region33: #{tpu_custom_call.1} parent=1 // pred_fallthru
      _
    %v63 = vld [vmem:[#allocation2] sm:$0xf]
    %v64 = vld [vmem:[#allocation2 + $0x4] sm:$0xf]
    %v65 = vld [vmem:[#allocation5] sm:$0xf]
    %v66 = vld [vmem:[#allocation5 + $0x4] sm:$0xf]
    %v67 = vld [vmem:[#allocation5 + $0x8] sm:$0xf]
    %v68 = vld [vmem:[#allocation5 + $0xc] sm:$0xf]
    %v69 = vld [vmem:[%s2] sm:$0x1]
    %v71 = vlaneseq
    %v72 = vshrl.u32 %v71, 7
    %v73 = vsub.s32 0, %v72
    %v74 = vrot.slane %v69, %v73
    %v78 = vunpack.c.l.b16 %v63
    %v79 = vunpack.c.l.b16 %v64
    %v80 = vpack.c.b16 %v79, %v78
    %v85 = vunpack.c.l.b16 %v65
    %v86 = vunpack.c.l.b16 %v66
    %v87 = vunpack.c.l.b16 %v67
    %v88 = vunpack.c.l.b16 %v68
    %v89 = vpack.c.b16 %v86, %v85
    %v90 = vpack.c.b16 %v88, %v87
    %vm93 = vcmask 261120
    %v95 = vsel %vm93, %v80, 0
    %97 = vmatprep.subr.bf16.mxu0 0
    %98 = vmatpush1.bf16.msra.mxu0 %v89
    %99 = vmatprep.subr.bf16.mxu0 0
    %100 = vmatpush1.bf16.msra.mxu0 %v90
    %101 = vmatprep.subr.bf16.mxu0 0
    %102 = vmatpush1.bf16.msra.mxu0 0
    %103 = vmatprep.subr.bf16.mxu0 0
    %104 = vmatpush1.bf16.msra.mxu0 0
    %105 = vmatprep.subr.bf16.mxu0 0
    %106 = vmatpush1.bf16.msra.mxu0 0
    %107 = vmatprep.subr.bf16.mxu0 0
    %108 = vmatpush1.bf16.msra.mxu0 0
    %109 = vmatprep.subr.bf16.mxu0 0
    %110 = vmatpush1.bf16.msra.mxu0 0
    %111 = vmatprep.subr.bf16.mxu0 0
    %112 = vmatpush1.bf16.msra.mxu0 0
    %113 = vmatprep.subr.bf16.mxu0 0
    %114 = vmatpush1.bf16.msra.mxu0 0
    %115 = vmatprep.subr.bf16.mxu0 0
    %116 = vmatpush1.bf16.msra.mxu0 0
    %117 = vmatprep.subr.bf16.mxu0 0
    %118 = vmatpush1.bf16.msra.mxu0 0
    %119 = vmatprep.subr.bf16.mxu0 0
    %120 = vmatpush1.bf16.msra.mxu0 0
    %121 = vmatprep.subr.bf16.mxu0 0
    %122 = vmatpush1.bf16.msra.mxu0 0
    %123 = vmatprep.subr.bf16.mxu0 0
    %124 = vmatpush1.bf16.msra.mxu0 0
    %125 = vmatprep.subr.bf16.mxu0 0
    %126 = vmatpush1.bf16.msra.mxu0 0
    %127 = vmatprep.subr.bf16.mxu0 0
    %128 = vmatpush1.bf16.msra.mxu0 0
    %129 = vmatprep.mubr.bf16.mxu0 0
    %130 = vmatmul.mubr.bf16.gmra.mrb[0].mxu0 %v95
    %v131 = vpop.f32.mrb[0].mxu0
    %v132 = vadd.f32 %v74, %v131
    %v133 = vpop.f32.mrb[0].mxu0
    %v134 = vpop.f32.mrb[0].mxu0
    %v135 = vadd.f32 %v74, %v134
    %v136 = vpop.f32.mrb[0].mxu0
    %137 = vdwg.mxu0
    %v138 = vpack.c.bf16 %v135, %v132
    %v139 = vld [vmem:[#allocation7] sm:$0xf]
    %v140 = vld [vmem:[#allocation7 + $0x4] sm:$0xf]
    %v141 = vld [vmem:[#allocation7 + $0x8] sm:$0xf]
    %v142 = vld [vmem:[#allocation7 + $0xc] sm:$0xf]
    %s143 = smul.u32 0, 128
    %s144 = sshra.s32 %s143, 7
    %s145 = sand.u32 %s143, 127
    %s146 = scalar_lea.vmem %s4, %s144
    %v147 = vld [vmem:[%s146] sm:$0x1]
    %v149 = vlaneseq
    %v150 = vshrl.u32 %v149, 7
    %v151 = vsub.s32 0, %v150
    %v152 = vrot.slane %v147, %v151
    %v158 = vunpack.c.l.b16 %v139
    %v159 = vunpack.c.l.b16 %v140
    %v160 = vunpack.c.l.b16 %v141
    %v161 = vunpack.c.l.b16 %v142
    %v162 = vpack.c.b16 %v159, %v158
    %v163 = vpack.c.b16 %v161, %v160
    %v167 = vsel %vm93, %v138, 0
    %169 = vmatprep.subr.bf16.mxu0 0
    %170 = vmatpush1.bf16.msra.mxu0 %v162
    %171 = vmatprep.subr.bf16.mxu0 0
    %172 = vmatpush1.bf16.msra.mxu0 %v163
    %173 = vmatprep.subr.bf16.mxu0 0
    %174 = vmatpush1.bf16.msra.mxu0 0
    %175 = vmatprep.subr.bf16.mxu0 0
    %176 = vmatpush1.bf16.msra.mxu0 0
    %177 = vmatprep.subr.bf16.mxu0 0
    %178 = vmatpush1.bf16.msra.mxu0 0
    %179 = vmatprep.subr.bf16.mxu0 0
    %180 = vmatpush1.bf16.msra.mxu0 0
    %181 = vmatprep.subr.bf16.mxu0 0
    %182 = vmatpush1.bf16.msra.mxu0 0
    %183 = vmatprep.subr.bf16.mxu0 0
    %184 = vmatpush1.bf16.msra.mxu0 0
    %185 = vmatprep.subr.bf16.mxu0 0
    %186 = vmatpush1.bf16.msra.mxu0 0
    %187 = vmatprep.subr.bf16.mxu0 0
    %188 = vmatpush1.bf16.msra.mxu0 0
    %189 = vmatprep.subr.bf16.mxu0 0
    %190 = vmatpush1.bf16.msra.mxu0 0
    %191 = vmatprep.subr.bf16.mxu0 0
    %192 = vmatpush1.bf16.msra.mxu0 0
    %193 = vmatprep.subr.bf16.mxu0 0
    %194 = vmatpush1.bf16.msra.mxu0 0
    %195 = vmatprep.subr.bf16.mxu0 0
    %196 = vmatpush1.bf16.msra.mxu0 0
    %197 = vmatprep.subr.bf16.mxu0 0
    %198 = vmatpush1.bf16.msra.mxu0 0
    %199 = vmatprep.subr.bf16.mxu0 0
    %200 = vmatpush1.bf16.msra.mxu0 0
    %201 = vmatprep.mubr.bf16.mxu0 0
    %202 = vmatmul.mubr.bf16.gmra.mrb[0].mxu0 %v167
    %v203 = vpop.f32.mrb[0].mxu0
    %v204 = vadd.f32 %v152, %v203
    %v205 = vpop.f32.mrb[0].mxu0
    %v206 = vpop.f32.mrb[0].mxu0
    %v207 = vadd.f32 %v152, %v206
    %v208 = vpop.f32.mrb[0].mxu0
    %209 = vdwg.mxu0
    %210 = vst [vmem:[#allocation8] sm:$0xff] %v204
    %211 = vst [vmem:[#allocation8 + $0x8] sm:$0xff] %v207
    // Predicated region
    $region34: #{tpu_custom_call.1} parent=1 // pred_check
      _
    $region35: #{tpu_custom_call.1} parent=1 // pred_check_branch
      %213 = sbr.rel (0) target = $region37
    $region36: #{tpu_custom_call.1} parent=1 // pred_region
      %s215 = ssub.s32 256, 256
      %216 = vsyncadd [#allocation4], %s215
      %s217 = sshll.u32 [#allocation8], 4
      %s218 = int_to_ptr.vmem [resolvable:$true] %s217
      %223 = dma.vmem_to_hbm [thread:$0]  %s218, 256, %s5, [#allocation4], 128, 128, 8
    $region37: #{tpu_custom_call.1} parent=1 // pred_fallthru
      _
    // Predicated region
    $region38: #{tpu_custom_call.1} parent=1 // pred_check
      _
    $region39: #{tpu_custom_call.1} parent=1 // pred_check_branch
      %225 = sbr.rel (0) target = $region41
    $region40: #{tpu_custom_call.1} parent=1 // pred_region
      %226 = dma.done [#allocation4], 256
    $region41: #{tpu_custom_call.1} parent=1 // pred_fallthru
      _
    %227 = vsyncpa [#allocation3], 1
    %228 = vsyncpa [#allocation6], 1
    %229 = vsyncpa [#allocation4], 1

</llo_original>
